<compile_context>
chip_gen: v6e
topology: v6e:2x2x1
jax: 0.10.0
libtpu: 0.0.40
codegen_flags: <defaults>
</compile_context>

<pallas_src>
import numpy as np
import jax
import jax.numpy as jnp
from jax.experimental import pallas as pl
from jax.experimental.pallas import tpu as pltpu


_LANE = 128
_MAX_BLOCK_BYTES = 4 * 1024 * 1024        # hot-path per-block cap
_FALLBACK_BLOCK_BYTES = 2 * 1024 * 1024   # fallback resident-block cap
_VMEM_LIMIT_BYTES = 32 * 1024 * 1024      # safe on v5e / v6e / v7x


def _sublane(itemsize):
    # Rows per vreg: f32 -> 8, bf16 -> 16, int8/fp8 -> 32.
    return max(8, 32 // max(int(itemsize), 1))


def _coalesce(shape, perm):
    """Drop size-1 dims and merge input dims that stay adjacent (and in order)
    under the permutation.  Returns (reduced_shape, reduced_perm)."""
    shape = tuple(int(s) for s in shape)
    kept = [a for a in perm if shape[a] != 1]
    if not kept:
        return (), ()
    groups = []  # in OUTPUT order; each group is a run of input axes
    for a in kept:
        if groups and a > groups[-1][-1] and all(
                shape[t] == 1 for t in range(groups[-1][-1] + 1, a)):
            groups[-1].append(a)
        else:
            groups.append([a])
    order_in = sorted(range(len(groups)), key=lambda g: groups[g][0])
    rshape = tuple(int(np.prod([shape[a] for a in groups[g]], dtype=np.int64))
                   for g in order_in)
    pos_in = {g: i for i, g in enumerate(order_in)}
    rperm = tuple(pos_in[g] for g in range(len(groups)))
    return rshape, rperm


# ----------------------------------------------------------------------------
# Hot path: batched transpose of the last two (reduced) dims.
# ----------------------------------------------------------------------------

def _transpose_kernel(x_ref, o_ref):
    # (tb, tr, tc) -> (tb, tc, tr): batched 2-D transpose on the XLU.  All the
    # coarse permutation work is done by the BlockSpec index_maps / DMA.
    o_ref[...] = jnp.transpose(x_ref[...], (0, 2, 1))


def _batched_transpose(x):
    """x: (B, R, C) -> (B, C, R), tiled and pipelined."""
    b, r, c = (int(s) for s in x.shape)
    itemsize = x.dtype.itemsize
    sub = _sublane(itemsize)
    max_elems = max(_MAX_BLOCK_BYTES // itemsize, sub * _LANE)

    # Lane dim of the input tile (becomes the sublane dim of the output tile):
    # full extent if modest, else a 128-aligned chunk.
    tc = c if c <= 2048 else 2048
    # Row dim of the input tile (becomes the lane dim of the output tile):
    # keep it full or a multiple of 128 so output stores stay lane-dense.
    row_budget = max(1, max_elems // tc)
    if r <= row_budget:
        tr = r
    else:
        align = _LANE if row_budget >= _LANE else sub
        tr = max(align, (row_budget // align) * align)
    # Aggregate batch elements per grid step when per-batch slabs are tiny
    # (amortizes per-step overhead); stays within the per-block byte cap.
    tb = max(1, min(b, max_elems // max(1, tr * tc)))

    grid = (pl.cdiv(b, tb), pl.cdiv(r, tr), pl.cdiv(c, tc))
    bytes_accessed = 2 * x.size * itemsize

    return pl.pallas_call(
        _transpose_kernel,
        out_shape=jax.ShapeDtypeStruct((b, c, r), x.dtype),
        grid=grid,
        in_specs=[pl.BlockSpec((tb, tr, tc), lambda nb, i, j: (nb, i, j))],
        out_specs=pl.BlockSpec((tb, tc, tr), lambda nb, i, j: (nb, j, i)),
        compiler_params=pltpu.CompilerParams(
            dimension_semantics=("parallel", "parallel", "parallel"),
            vmem_limit_bytes=_VMEM_LIMIT_BYTES),
        cost_estimate=pl.CostEstimate(
            flops=0, transcendentals=0, bytes_accessed=bytes_accessed),
    )(x)


# ----------------------------------------------------------------------------
# General fallback: arbitrary (reduced) permutation.
# ----------------------------------------------------------------------------

def _general_permute(x, perm):
    """Fallback for permutations that do not reduce to a batched last-two-dim
    swap.  The tiling-constrained axes (last two input axes and the input axes
    feeding the last two output axes) stay resident inside the block — tiled
    with aligned sub-blocks if they would exceed the VMEM byte budget — while
    every other axis is gridded with size-1 blocks and its permutation is
    carried entirely by the index_maps."""
    m = x.ndim
    shape = tuple(int(s) for s in x.shape)
    perm = tuple(int(a) for a in perm)
    itemsize = x.dtype.itemsize
    sub = _sublane(itemsize)
    out_shape = tuple(shape[a] for a in perm)

    # Input axes that must stay (at least partially) resident so the (8, 128)
    # BlockSpec rule holds for both the input and the output block.
    full_axes = sorted({m - 2, m - 1, perm[-2], perm[-1]})

    def _align(a):
        # Lane alignment if the axis is the last dim of either array,
        # otherwise sublane alignment.
        return _LANE if (a == m - 1 or a == perm[-1]) else sub

    # Byte-cap the resident block: shrink sublane-constrained axes first so
    # lane dims stay wide (lane-dense loads/stores).
    budget = max(_FALLBACK_BLOCK_BYTES // itemsize, sub * _LANE)
    blk = {a: shape[a] for a in full_axes}
    for a in sorted(full_axes, key=lambda a: (_align(a), -shape[a])):
        cur = int(np.prod(list(blk.values()), dtype=np.int64))
        if cur <= budget:
            break
        al = _align(a)
        if blk[a] <= al:
            continue
        others = max(1, cur // blk[a])
        target = max(1, budget // others)
        nb = max(al, (target // al) * al)
        if nb < blk[a]:
            blk[a] = nb

    # Grid axes: (a) every output axis whose source axis is not resident
    # (block 1, permutation carried by the index_maps), (b) one axis per
    # tiled resident input axis.
    grid_small = [k for k in range(m) if perm[k] not in full_axes]
    grid_tiled = [a for a in full_axes if blk[a] < shape[a]]
    grid = tuple([out_shape[k] for k in grid_small] +
                 [pl.cdiv(shape[a], blk[a]) for a in grid_tiled])
    if not grid:
        grid = (1,)
    n_small = len(grid_small)

    in_block = tuple(blk[a] if a in blk else 1 for a in range(m))
    out_block = tuple(blk[perm[k]] if perm[k] in blk else 1 for k in range(m))

    def in_index_map(*ids):
        idx = [0] * m
        for g, k in enumerate(grid_small):
            idx[perm[k]] = ids[g]
        for g, a in enumerate(grid_tiled):
            idx[a] = ids[n_small + g]
        return tuple(idx)

    def out_index_map(*ids):
        idx = [0] * m
        for g, k in enumerate(grid_small):
            idx[k] = ids[g]
        for g, a in enumerate(grid_tiled):
            idx[perm.index(a)] = ids[n_small + g]
        return tuple(idx)

    def kernel(x_ref, o_ref):
        # Non-resident axes are size 1, so this is a small transpose of the
        # resident axes only.
        o_ref[...] = jnp.transpose(x_ref[...], perm)

    bytes_accessed = 2 * x.size * itemsize
    return pl.pallas_call(
        kernel,
        out_shape=jax.ShapeDtypeStruct(out_shape, x.dtype),
        grid=grid,
        in_specs=[pl.BlockSpec(in_block, in_index_map)],
        out_specs=pl.BlockSpec(out_block, out_index_map),
        compiler_params=pltpu.CompilerParams(
            dimension_semantics=("parallel",) * len(grid),
            vmem_limit_bytes=_VMEM_LIMIT_BYTES),
        cost_estimate=pl.CostEstimate(
            flops=0, transcendentals=0, bytes_accessed=bytes_accessed),
    )(x)


# ----------------------------------------------------------------------------
# Module wrapper
# ----------------------------------------------------------------------------

class PermutePallas:
    """Pallas equivalent of the torch Permute module."""

    def __init__(self, order, order_includes_batch=False, contiguous=True):
        self.order = list(order)
        self.order_includes_batch = order_includes_batch
        # pallas_call always materializes a fresh contiguous buffer, so
        # `contiguous=False` (a strided torch view) has identical values.
        self.contiguous = contiguous
        self.full_ord = (
            self.order if self.order_includes_batch else [0] + self.order)
        assert (len(np.unique(self.full_ord)) == len(self.full_ord)
                and np.amax(self.full_ord) < len(self.full_ord)), self.full_ord

    def __call__(self, x):
        full_ord = tuple(self.full_ord)
        assert x.ndim == len(full_ord), (x.shape, full_ord)
        out_shape = tuple(int(x.shape[a]) for a in full_ord)

        rshape, rperm = _coalesce(x.shape, full_ord)
        m = len(rperm)

        # Case 1: permutation is a pure reshape (only size-1 dims move) — no
        # data movement needed, matches torch values exactly.
        if m <= 1 or rperm == tuple(range(m)):
            return jnp.reshape(x, out_shape)

        # Case 2 (hot path): batched swap of the last two reduced dims.
        # Covers NCHW<->NHWC, plain 2-D transposes, etc.  The wrapper reshapes
        # are free (merge adjacent dims of a contiguous array).
        if rperm == tuple(range(m - 2)) + (m - 1, m - 2):
            batch = int(np.prod(rshape[:-2], dtype=np.int64)) if m > 2 else 1
            rows, cols = int(rshape[-2]), int(rshape[-1])
            y = _batched_transpose(jnp.reshape(x, (batch, rows, cols)))
            return jnp.reshape(y, out_shape)

        # Case 3: general fallback.
        y = _general_permute(jnp.reshape(x, rshape), rperm)
        return jnp.reshape(y, out_shape)


if __name__ == "__main__":
    key = jax.random.PRNGKey(0)
    # NCHW input, small shapes.
    x = jax.random.normal(key, (2, 4, 16, 16), dtype=jnp.float32)

    # Canonical use: NCHW -> NHWC, i.e. order = [2, 3, 1] (batch not included).
    perm = PermutePallas(order=[2, 3, 1], order_includes_batch=False,
                         contiguous=True)
    out = jax.block_until_ready(perm(x))
    ref = jnp.transpose(x, (0, 2, 3, 1))
    assert out.shape == ref.shape, (out.shape, ref.shape)
    assert out.dtype == ref.dtype
    np.testing.assert_array_equal(np.asarray(out), np.asarray(ref))

    # NHWC -> NCHW (same hot path, other direction).
    x_nhwc = jnp.transpose(x, (0, 2, 3, 1))
    perm2 = PermutePallas(order=[3, 1, 2])
    out2 = jax.block_until_ready(perm2(x_nhwc))
    np.testing.assert_array_equal(
        np.asarray(out2), np.asarray(jnp.transpose(x_nhwc, (0, 3, 1, 2))))

    # A permutation that keeps the last axis (general fallback, one block).
    x3 = jax.random.normal(jax.random.PRNGKey(1), (2, 4, 8, 32),
                           dtype=jnp.float32)
    perm3 = PermutePallas(order=[2, 1, 3])
    out3 = jax.block_until_ready(perm3(x3))
    np.testing.assert_array_equal(
        np.asarray(out3), np.asarray(jnp.transpose(x3, (0, 2, 1, 3))))

    # Same permutation at a size where the resident block exceeds the byte
    # budget, exercising the tiled fallback (extra grid axis, aligned blocks).
    x4 = jax.random.normal(jax.random.PRNGKey(2), (2, 8, 256, 512),
                           dtype=jnp.float32)
    perm4 = PermutePallas(order=[2, 1, 3])
    out4 = jax.block_until_ready(perm4(x4))
    np.testing.assert_array_equal(
        np.asarray(out4), np.asarray(jnp.transpose(x4, (0, 2, 1, 3))))

    print("KERNEL_OK")
</pallas_src>

<mosaic_0001>
module attributes {stable_mosaic.version = 11 : i64} {
  func.func @_transpose_kernel(%arg0: i32, %arg1: i32, %arg2: i32, %arg3: memref<2x4x256xf32, #tpu.memory_space<vmem>>, %arg4: memref<2x256x4xf32, #tpu.memory_space<vmem>>) attributes {dimension_semantics = [#tpu.dimension_semantics<parallel>, #tpu.dimension_semantics<parallel>, #tpu.dimension_semantics<parallel>], iteration_bounds = array<i64: 1, 1, 1>, scalar_prefetch = 0 : i64, scratch_operands = 0 : i64, tpu.core_type = #tpu.core_type<tc>, window_params = [{transform_indices = @transform_0, window_bounds = array<i64: 2, 4, 256>}, {transform_indices = @transform_1, window_bounds = array<i64: 2, 256, 4>}]} {
    %c0 = arith.constant 0 : index
    %c0_0 = arith.constant 0 : index
    %c0_1 = arith.constant 0 : index
    %0 = vector.load %arg3[%c0, %c0_0, %c0_1] : memref<2x4x256xf32, #tpu.memory_space<vmem>>, vector<2x4x256xf32>
    %1 = tpu.transpose %0, [0, 2, 1] : vector<2x4x256xf32> -> vector<2x256x4xf32>
    %c0_2 = arith.constant 0 : index
    %c0_3 = arith.constant 0 : index
    %c0_4 = arith.constant 0 : index
    %2 = vector.load %arg4[%c0_2, %c0_3, %c0_4] : memref<2x256x4xf32, #tpu.memory_space<vmem>>, vector<2x256x4xf32>
    tpu.vector_store %arg4[%c0_2, %c0_3, %c0_4], %1 {strides = array<i32>} : memref<2x256x4xf32, #tpu.memory_space<vmem>>, vector<2x256x4xf32>,
    return
  }
  func.func @transform_0(%arg0: i32, %arg1: i32, %arg2: i32) -> (i32, i32, i32) {
    %c0_i32 = arith.constant 0 : i32
    return %arg0, %arg1, %arg2 : i32, i32, i32
  }
  func.func @transform_1(%arg0: i32, %arg1: i32, %arg2: i32) -> (i32, i32, i32) {
    %c0_i32 = arith.constant 0 : i32
    return %arg0, %arg2, %arg1 : i32, i32, i32
  }
}

</mosaic_0001>

<llo_original>
// kernel: tpu_custom_call.1
$region0: #{tpu_custom_call.1}
  #allocation0 [shape = 'u32[]', space=smem, size = 0x4, offset = 0x4, fixed_abs, tag = 'smem constant byte address 0x4 - core index']
  #allocation1 [shape = 'u32[144,128]{1,0:T(1,128)}', space=vmem, size = 0x12000, scoped, tag = 'internal scratch']
  %s0 = inlined_call_operand.hbm [shape: f32[2,4,256], index: 0, kind: input, shape index: {}]
  %s1 = inlined_call_operand.vmem [shape: f32[2,256,4], index: 1, kind: output, shape index: {}]
  %s2 = sld [smem:[#allocation0]]
  $region18: #{tpu_custom_call.1} parent=0
    _
  %s4 = ssub.s32 1, %s2
  %s5 = scalar_select 0, %s4, %s2
  $region1: #{tpu_custom_call.1} parent=0
    #allocation2 [shape = 'u8[8192]{0}', space=vmem, size = 0x2000, scoped, tag = 'input window, operand 0, single buffered']
    #allocation3 [shape = 's32[1]{0}', space=sflag, size = 0x4, scoped, tag = 'scoped memory for tpu_custom_call.1']
    %6 = vsyncpa [#allocation3], 0
    // Predicated region
    $region2: #{tpu_custom_call.1} parent=1 // pred_check
      _
    $region3: #{tpu_custom_call.1} parent=1 // pred_check_branch
      %8 = sbr.rel (0) target = $region5
    $region4: #{tpu_custom_call.1} parent=1 // pred_region
      %s10 = ssub.s32 256, 256
      %11 = vsyncadd [#allocation3], %s10
      %s12 = sshll.u32 [#allocation2], 4
      %s13 = int_to_ptr.vmem [resolvable:$true] %s12
      %18 = dma.hbm_to_vmem [thread:$0]  %s0, 256, %s13, [#allocation3], 128, 128, 8
    $region5: #{tpu_custom_call.1} parent=1 // pred_fallthru
      _
    // Predicated region
    $region6: #{tpu_custom_call.1} parent=1 // pred_check
      _
    $region7: #{tpu_custom_call.1} parent=1 // pred_check_branch
      %20 = sbr.rel (0) target = $region9
    $region8: #{tpu_custom_call.1} parent=1 // pred_region
      %21 = dma.done [#allocation3], 256
    $region9: #{tpu_custom_call.1} parent=1 // pred_fallthru
      _
    %v22 = vld [vmem:[#allocation2] sm:$0xff]
    %v23 = vld [vmem:[#allocation2 + $0x8] sm:$0xff]
    %v26 = vcombine.high %v22, %v22
    %v27 = vcombine.high %v23, %v23
    %30 = vxpose.xlu0.b32.start [1/16] %v22, 128
    %31 = vxpose.xlu0.b32.cont [2/16] 0.0, 128
    %32 = vxpose.xlu0.b32.cont [3/16] 0.0, 128
    %33 = vxpose.xlu0.b32.cont [4/16] 0.0, 128
    %34 = vxpose.xlu0.b32.cont [5/16] 0.0, 128
    %35 = vxpose.xlu0.b32.cont [6/16] 0.0, 128
    %36 = vxpose.xlu0.b32.cont [7/16] 0.0, 128
    %37 = vxpose.xlu0.b32.cont [8/16] 0.0, 128
    %38 = vxpose.xlu0.b32.cont [9/16] 0.0, 128
    %39 = vxpose.xlu0.b32.cont [10/16] 0.0, 128
    %40 = vxpose.xlu0.b32.cont [11/16] 0.0, 128
    %41 = vxpose.xlu0.b32.cont [12/16] 0.0, 128
    %42 = vxpose.xlu0.b32.cont [13/16] 0.0, 128
    %43 = vxpose.xlu0.b32.cont [14/16] 0.0, 128
    %44 = vxpose.xlu0.b32.cont [15/16] 0.0, 128
    %45 = vxpose.xlu0.b32.end [16/16] 0.0, 128
    %v46 = vpop.trf.xlu0
    %v47 = vpop.trf.xlu0
    %v48 = vpop.trf.xlu0
    %v49 = vpop.trf.xlu0
    %v50 = vpop.trf.xlu0
    %v51 = vpop.trf.xlu0
    %v52 = vpop.trf.xlu0
    %v53 = vpop.trf.xlu0
    %v54 = vpop.trf.xlu0
    %v55 = vpop.trf.xlu0
    %v56 = vpop.trf.xlu0
    %v57 = vpop.trf.xlu0
    %v58 = vpop.trf.xlu0
    %v59 = vpop.trf.xlu0
    %v60 = vpop.trf.xlu0
    %v61 = vpop.trf.xlu0
    %62 = vxpose.xlu0.b32.start [1/16] %v26, 128
    %63 = vxpose.xlu0.b32.cont [2/16] 0.0, 128
    %64 = vxpose.xlu0.b32.cont [3/16] 0.0, 128
    %65 = vxpose.xlu0.b32.cont [4/16] 0.0, 128
    %66 = vxpose.xlu0.b32.cont [5/16] 0.0, 128
    %67 = vxpose.xlu0.b32.cont [6/16] 0.0, 128
    %68 = vxpose.xlu0.b32.cont [7/16] 0.0, 128
    %69 = vxpose.xlu0.b32.cont [8/16] 0.0, 128
    %70 = vxpose.xlu0.b32.cont [9/16] 0.0, 128
    %71 = vxpose.xlu0.b32.cont [10/16] 0.0, 128
    %72 = vxpose.xlu0.b32.cont [11/16] 0.0, 128
    %73 = vxpose.xlu0.b32.cont [12/16] 0.0, 128
    %74 = vxpose.xlu0.b32.cont [13/16] 0.0, 128
    %75 = vxpose.xlu0.b32.cont [14/16] 0.0, 128
    %76 = vxpose.xlu0.b32.cont [15/16] 0.0, 128
    %77 = vxpose.xlu0.b32.end [16/16] 0.0, 128
    %v78 = vpop.trf.xlu0
    %v79 = vpop.trf.xlu0
    %v80 = vpop.trf.xlu0
    %v81 = vpop.trf.xlu0
    %v82 = vpop.trf.xlu0
    %v83 = vpop.trf.xlu0
    %v84 = vpop.trf.xlu0
    %v85 = vpop.trf.xlu0
    %v86 = vpop.trf.xlu0
    %v87 = vpop.trf.xlu0
    %v88 = vpop.trf.xlu0
    %v89 = vpop.trf.xlu0
    %v90 = vpop.trf.xlu0
    %v91 = vpop.trf.xlu0
    %v92 = vpop.trf.xlu0
    %v93 = vpop.trf.xlu0
    %94 = vxpose.xlu0.b32.start [1/16] %v23, 128
    %95 = vxpose.xlu0.b32.cont [2/16] 0.0, 128
    %96 = vxpose.xlu0.b32.cont [3/16] 0.0, 128
    %97 = vxpose.xlu0.b32.cont [4/16] 0.0, 128
    %98 = vxpose.xlu0.b32.cont [5/16] 0.0, 128
    %99 = vxpose.xlu0.b32.cont [6/16] 0.0, 128
    %100 = vxpose.xlu0.b32.cont [7/16] 0.0, 128
    %101 = vxpose.xlu0.b32.cont [8/16] 0.0, 128
    %102 = vxpose.xlu0.b32.cont [9/16] 0.0, 128
    %103 = vxpose.xlu0.b32.cont [10/16] 0.0, 128
    %104 = vxpose.xlu0.b32.cont [11/16] 0.0, 128
    %105 = vxpose.xlu0.b32.cont [12/16] 0.0, 128
    %106 = vxpose.xlu0.b32.cont [13/16] 0.0, 128
    %107 = vxpose.xlu0.b32.cont [14/16] 0.0, 128
    %108 = vxpose.xlu0.b32.cont [15/16] 0.0, 128
    %109 = vxpose.xlu0.b32.end [16/16] 0.0, 128
    %v110 = vpop.trf.xlu0
    %v111 = vpop.trf.xlu0
    %v112 = vpop.trf.xlu0
    %v113 = vpop.trf.xlu0
    %v114 = vpop.trf.xlu0
    %v115 = vpop.trf.xlu0
    %v116 = vpop.trf.xlu0
    %v117 = vpop.trf.xlu0
    %v118 = vpop.trf.xlu0
    %v119 = vpop.trf.xlu0
    %v120 = vpop.trf.xlu0
    %v121 = vpop.trf.xlu0
    %v122 = vpop.trf.xlu0
    %v123 = vpop.trf.xlu0
    %v124 = vpop.trf.xlu0
    %v125 = vpop.trf.xlu0
    %126 = vxpose.xlu0.b32.start [1/16] %v27, 128
    %127 = vxpose.xlu0.b32.cont [2/16] 0.0, 128
    %128 = vxpose.xlu0.b32.cont [3/16] 0.0, 128
    %129 = vxpose.xlu0.b32.cont [4/16] 0.0, 128
    %130 = vxpose.xlu0.b32.cont [5/16] 0.0, 128
    %131 = vxpose.xlu0.b32.cont [6/16] 0.0, 128
    %132 = vxpose.xlu0.b32.cont [7/16] 0.0, 128
    %133 = vxpose.xlu0.b32.cont [8/16] 0.0, 128
    %134 = vxpose.xlu0.b32.cont [9/16] 0.0, 128
    %135 = vxpose.xlu0.b32.cont [10/16] 0.0, 128
    %136 = vxpose.xlu0.b32.cont [11/16] 0.0, 128
    %137 = vxpose.xlu0.b32.cont [12/16] 0.0, 128
    %138 = vxpose.xlu0.b32.cont [13/16] 0.0, 128
    %139 = vxpose.xlu0.b32.cont [14/16] 0.0, 128
    %140 = vxpose.xlu0.b32.cont [15/16] 0.0, 128
    %141 = vxpose.xlu0.b32.end [16/16] 0.0, 128
    %v142 = vpop.trf.xlu0
    %v143 = vpop.trf.xlu0
    %v144 = vpop.trf.xlu0
    %v145 = vpop.trf.xlu0
    %v146 = vpop.trf.xlu0
    %v147 = vpop.trf.xlu0
    %v148 = vpop.trf.xlu0
    %v149 = vpop.trf.xlu0
    %v150 = vpop.trf.xlu0
    %v151 = vpop.trf.xlu0
    %v152 = vpop.trf.xlu0
    %v153 = vpop.trf.xlu0
    %v154 = vpop.trf.xlu0
    %v155 = vpop.trf.xlu0
    %v156 = vpop.trf.xlu0
    %v157 = vpop.trf.xlu0
    %vm158 = vcmask 31744
    %159 = vst.msk [vmem:[%s1] sm:$0xff] %vm158, %v46
    %160 = vst.msk [vmem:[%s1 + $0x8] sm:$0xff] %vm158, %v47
    %161 = vst.msk [vmem:[%s1 + $0x10] sm:$0xff] %vm158, %v48
    %162 = vst.msk [vmem:[%s1 + $0x18] sm:$0xff] %vm158, %v49
    %163 = vst.msk [vmem:[%s1 + $0x20] sm:$0xff] %vm158, %v50
    %164 = vst.msk [vmem:[%s1 + $0x28] sm:$0xff] %vm158, %v51
    %165 = vst.msk [vmem:[%s1 + $0x30] sm:$0xff] %vm158, %v52
    %166 = vst.msk [vmem:[%s1 + $0x38] sm:$0xff] %vm158, %v53
    %167 = vst.msk [vmem:[%s1 + $0x40] sm:$0xff] %vm158, %v54
    %168 = vst.msk [vmem:[%s1 + $0x48] sm:$0xff] %vm158, %v55
    %169 = vst.msk [vmem:[%s1 + $0x50] sm:$0xff] %vm158, %v56
    %170 = vst.msk [vmem:[%s1 + $0x58] sm:$0xff] %vm158, %v57
    %171 = vst.msk [vmem:[%s1 + $0x60] sm:$0xff] %vm158, %v58
    %172 = vst.msk [vmem:[%s1 + $0x68] sm:$0xff] %vm158, %v59
    %173 = vst.msk [vmem:[%s1 + $0x70] sm:$0xff] %vm158, %v60
    %174 = vst.msk [vmem:[%s1 + $0x78] sm:$0xff] %vm158, %v61
    %175 = vst.msk [vmem:[%s1 + $0x80] sm:$0xff] %vm158, %v78
    %176 = vst.msk [vmem:[%s1 + $0x88] sm:$0xff] %vm158, %v79
    %177 = vst.msk [vmem:[%s1 + $0x90] sm:$0xff] %vm158, %v80
    %178 = vst.msk [vmem:[%s1 + $0x98] sm:$0xff] %vm158, %v81
    %179 = vst.msk [vmem:[%s1 + $0xa0] sm:$0xff] %vm158, %v82
    %180 = vst.msk [vmem:[%s1 + $0xa8] sm:$0xff] %vm158, %v83
    %181 = vst.msk [vmem:[%s1 + $0xb0] sm:$0xff] %vm158, %v84
    %182 = vst.msk [vmem:[%s1 + $0xb8] sm:$0xff] %vm158, %v85
    %183 = vst.msk [vmem:[%s1 + $0xc0] sm:$0xff] %vm158, %v86
    %184 = vst.msk [vmem:[%s1 + $0xc8] sm:$0xff] %vm158, %v87
    %185 = vst.msk [vmem:[%s1 + $0xd0] sm:$0xff] %vm158, %v88
    %186 = vst.msk [vmem:[%s1 + $0xd8] sm:$0xff] %vm158, %v89
    %187 = vst.msk [vmem:[%s1 + $0xe0] sm:$0xff] %vm158, %v90
    %188 = vst.msk [vmem:[%s1 + $0xe8] sm:$0xff] %vm158, %v91
    %189 = vst.msk [vmem:[%s1 + $0xf0] sm:$0xff] %vm158, %v92
    %190 = vst.msk [vmem:[%s1 + $0xf8] sm:$0xff] %vm158, %v93
    %191 = vst.msk [vmem:[%s1 + $0x100] sm:$0xff] %vm158, %v110
    %192 = vst.msk [vmem:[%s1 + $0x108] sm:$0xff] %vm158, %v111
    %193 = vst.msk [vmem:[%s1 + $0x110] sm:$0xff] %vm158, %v112
    %194 = vst.msk [vmem:[%s1 + $0x118] sm:$0xff] %vm158, %v113
    %195 = vst.msk [vmem:[%s1 + $0x120] sm:$0xff] %vm158, %v114
    %196 = vst.msk [vmem:[%s1 + $0x128] sm:$0xff] %vm158, %v115
    %197 = vst.msk [vmem:[%s1 + $0x130] sm:$0xff] %vm158, %v116
    %198 = vst.msk [vmem:[%s1 + $0x138] sm:$0xff] %vm158, %v117
    %199 = vst.msk [vmem:[%s1 + $0x140] sm:$0xff] %vm158, %v118
    %200 = vst.msk [vmem:[%s1 + $0x148] sm:$0xff] %vm158, %v119
    %201 = vst.msk [vmem:[%s1 + $0x150] sm:$0xff] %vm158, %v120
    %202 = vst.msk [vmem:[%s1 + $0x158] sm:$0xff] %vm158, %v121
    %203 = vst.msk [vmem:[%s1 + $0x160] sm:$0xff] %vm158, %v122
    %204 = vst.msk [vmem:[%s1 + $0x168] sm:$0xff] %vm158, %v123
    %205 = vst.msk [vmem:[%s1 + $0x170] sm:$0xff] %vm158, %v124
    %206 = vst.msk [vmem:[%s1 + $0x178] sm:$0xff] %vm158, %v125
    %207 = vst.msk [vmem:[%s1 + $0x180] sm:$0xff] %vm158, %v142
    %208 = vst.msk [vmem:[%s1 + $0x188] sm:$0xff] %vm158, %v143
    %209 = vst.msk [vmem:[%s1 + $0x190] sm:$0xff] %vm158, %v144
    %210 = vst.msk [vmem:[%s1 + $0x198] sm:$0xff] %vm158, %v145
    %211 = vst.msk [vmem:[%s1 + $0x1a0] sm:$0xff] %vm158, %v146
    %212 = vst.msk [vmem:[%s1 + $0x1a8] sm:$0xff] %vm158, %v147
    %213 = vst.msk [vmem:[%s1 + $0x1b0] sm:$0xff] %vm158, %v148
    %214 = vst.msk [vmem:[%s1 + $0x1b8] sm:$0xff] %vm158, %v149
    %215 = vst.msk [vmem:[%s1 + $0x1c0] sm:$0xff] %vm158, %v150
    %216 = vst.msk [vmem:[%s1 + $0x1c8] sm:$0xff] %vm158, %v151
    %217 = vst.msk [vmem:[%s1 + $0x1d0] sm:$0xff] %vm158, %v152
    %218 = vst.msk [vmem:[%s1 + $0x1d8] sm:$0xff] %vm158, %v153
    %219 = vst.msk [vmem:[%s1 + $0x1e0] sm:$0xff] %vm158, %v154
    %220 = vst.msk [vmem:[%s1 + $0x1e8] sm:$0xff] %vm158, %v155
    %221 = vst.msk [vmem:[%s1 + $0x1f0] sm:$0xff] %vm158, %v156
    %222 = vst.msk [vmem:[%s1 + $0x1f8] sm:$0xff] %vm158, %v157
    // Predicated region
    $region10: #{tpu_custom_call.1} parent=1 // pred_check
      _
    $region11: #{tpu_custom_call.1} parent=1 // pred_check_branch
      %224 = sbr.rel (0) target = $region13
    $region12: #{tpu_custom_call.1} parent=1 // pred_region
      _
    $region13: #{tpu_custom_call.1} parent=1 // pred_fallthru
      _
    // Predicated region
    $region14: #{tpu_custom_call.1} parent=1 // pred_check
      _
    $region15: #{tpu_custom_call.1} parent=1 // pred_check_branch
      %226 = sbr.rel (0) target = $region17
    $region16: #{tpu_custom_call.1} parent=1 // pred_region
      _
    $region17: #{tpu_custom_call.1} parent=1 // pred_fallthru
      _
    %227 = vsyncpa [#allocation3], 1

</llo_original>
